<compile_context>
chip_gen: v5e
topology: v5e:2x2
jax: 0.10.0
libtpu: 0.0.40
codegen_flags: <defaults>
</compile_context>

<pallas_src>
import functools

import jax
import jax.numpy as jnp
from jax.experimental import pallas as pl
from jax.experimental.pallas import tpu as pltpu


def _round_up(v, m):
    return (v + m - 1) // m * m


def _linear_act_kernel(x_ref, w_ref, b_ref, o_ref, *, activation):
    """One (i, j) tile of y = act(x @ W + b). Full-K block => single MXU matmul."""
    acc = jnp.dot(x_ref[...], w_ref[...], preferred_element_type=jnp.float32)
    acc = acc + b_ref[...].astype(jnp.float32)          # (tm, tn) + (1, tn)
    if activation == "tanh":
        acc = jnp.tanh(acc)                              # EUP; essentially free
    elif activation == "relu":
        acc = jnp.maximum(acc, 0.0)
    o_ref[...] = acc.astype(o_ref.dtype)


def _fused_linear_act(x, w, b, activation):
    """act(x @ w + b) with a tiled Pallas TPU kernel.

    x: (M, K)   w: (K, N)  (torch (out, in) weight pre-transposed)   b: (N,)
    """
    M, K = x.shape
    Kw, N = w.shape
    assert K == Kw and b.shape == (N,)

    # ---- tile selection ---------------------------------------------------
    Kp = _round_up(K, 128)           # lane dim of x / sublane dim of w
    Np = _round_up(N, 128)           # lane-dense output
    if M <= 512:                     # small batch (real use case): one row tile
        tm = _round_up(M, 8)
        Mp = tm
    else:                            # large batch: 256-row tiles
        tm = 256
        Mp = _round_up(M, tm)
    if Np <= 256:
        tn = Np
    elif Np % 256 == 0:
        tn = 256                     # matches 2x256x256 MXU; >= 2 parallel j blocks
    else:
        tn = 128

    # ---- zero-pad operands to tile multiples (result sliced at the end) ----
    xp = x
    if (Mp, Kp) != (M, K):
        xp = jnp.zeros((Mp, Kp), x.dtype).at[:M, :K].set(x)
    wp = w
    if (Kp, Np) != (K, N):
        wp = jnp.zeros((Kp, Np), w.dtype).at[:K, :N].set(w)
    bp = b.reshape(1, N)
    if Np != N:
        bp = jnp.zeros((1, Np), b.dtype).at[:, :N].set(bp)

    grid = (Mp // tm, Np // tn)

    # ---- explicit VMEM budget (double-buffered tiles + headroom) -----------
    vmem_est = 2 * (
        tm * Kp * xp.dtype.itemsize
        + Kp * tn * wp.dtype.itemsize
        + tm * tn * x.dtype.itemsize
        + tn * bp.dtype.itemsize
    )
    vmem_limit = int(min(max(vmem_est + (4 << 20), 16 << 20), 64 << 20))

    cost = pl.CostEstimate(
        flops=int(2 * Mp * Np * Kp),
        transcendentals=int(Mp * Np) if activation == "tanh" else 0,
        bytes_accessed=int(
            Mp * Kp * xp.dtype.itemsize                       # x (each i tile once)
            + grid[0] * Kp * Np * wp.dtype.itemsize           # W per row-tile
            + Mp * Np * x.dtype.itemsize                      # output
        ),
    )

    kernel = functools.partial(_linear_act_kernel, activation=activation)

    out = pl.pallas_call(
        kernel,
        out_shape=jax.ShapeDtypeStruct((Mp, Np), x.dtype),
        grid_spec=pltpu.PrefetchScalarGridSpec(
            num_scalar_prefetch=0,
            grid=grid,
            in_specs=[
                pl.BlockSpec((tm, Kp), lambda i, j: (i, 0)),   # x row-tile, full K
                pl.BlockSpec((Kp, tn), lambda i, j: (0, j)),   # W col-tile, full K
                pl.BlockSpec((1, tn), lambda i, j: (0, j)),    # bias tile
            ],
            out_specs=pl.BlockSpec((tm, tn), lambda i, j: (i, j)),
        ),
        compiler_params=pltpu.CompilerParams(
            dimension_semantics=("parallel", "parallel"),
            vmem_limit_bytes=vmem_limit,
        ),
        cost_estimate=cost,
    )(xp, wp, bp)

    if (Mp, Np) != (M, N):
        out = out[:M, :N]
    return out


@jax.jit
def connector_mlp_forward(x, weights, biases):
    """ConnectorMLP forward: hidden Linear+ReLU layers, final Linear+Tanh.

    weights[i]: (in_dim, out_dim)  (torch's (out, in) weight pre-transposed)
    biases[i]:  (out_dim,)
    Default config (num_hidden_layers=1) is a single Linear + Tanh.
    """
    h = x
    n = len(weights)
    for idx in range(n):
        act = "tanh" if idx == n - 1 else "relu"
        h = _fused_linear_act(h, weights[idx], biases[idx], act)
    return h


def connector_mlp_reference(x, weights, biases):
    """Plain-JAX reference: same math as the torch module."""
    h = x
    n = len(weights)
    for idx in range(n):
        h = h @ weights[idx].astype(jnp.float32) + biases[idx]
        h = jnp.tanh(h) if idx == n - 1 else jnp.maximum(h, 0.0)
    return h


def init_connector_mlp_params(key, connect_dim, clip_dim, num_hidden_layers=1,
                              weight_dtype=jnp.float32):
    """nn.Linear-style U(-1/sqrt(fan_in), 1/sqrt(fan_in)) init; weights pre-transposed."""
    weights, biases = [], []
    in_dim = connect_dim
    layer_keys = jax.random.split(key, num_hidden_layers)
    for li in range(num_hidden_layers):
        out_dim = clip_dim if li == num_hidden_layers - 1 else in_dim // 2
        kw, kb = jax.random.split(layer_keys[li])
        bound = float(in_dim) ** -0.5
        w = jax.random.uniform(kw, (in_dim, out_dim), jnp.float32, -bound, bound)
        b = jax.random.uniform(kb, (out_dim,), jnp.float32, -bound, bound)
        weights.append(w.astype(weight_dtype))
        biases.append(b)
        in_dim = out_dim
    return tuple(weights), tuple(biases)


if __name__ == "__main__":
    key = jax.random.PRNGKey(0)
    kx, kp, kx2, kp2 = jax.random.split(key, 4)

    # 1) Default config (num_hidden_layers=1): single Linear + Tanh.
    #    Small stand-in shapes for (batch, 768+2048) -> (batch, 768).
    batch, connect_dim, clip_dim = 8, 256, 128
    x = jax.random.normal(kx, (batch, connect_dim), jnp.float32)
    w, b = init_connector_mlp_params(kp, connect_dim, clip_dim, num_hidden_layers=1)
    y = jax.block_until_ready(connector_mlp_forward(x, w, b))
    y_ref = connector_mlp_reference(x, w, b)
    assert y.shape == (batch, clip_dim)
    assert jnp.allclose(y, y_ref, atol=1e-5, rtol=1e-5), "default-config mismatch"

    # 2) num_hidden_layers=2 with ragged (non tile-multiple) dims: exercises the
    #    ReLU hidden layer and the zero-padding path.
    x2 = jax.random.normal(kx2, (5, 200), jnp.float32)
    w2, b2 = init_connector_mlp_params(kp2, 200, 96, num_hidden_layers=2)
    y2 = jax.block_until_ready(connector_mlp_forward(x2, w2, b2))
    assert y2.shape == (5, 96)
    assert jnp.allclose(
        y2, connector_mlp_reference(x2, w2, b2), atol=1e-5, rtol=1e-5
    ), "hidden-layer / ragged-shape mismatch"

    print("KERNEL_OK")
</pallas_src>

<mosaic_0001>
module attributes {stable_mosaic.version = 11 : i64} {
  func.func @_linear_act_kernel(%arg0: i32, %arg1: i32, %arg2: memref<8x256xf32, #tpu.memory_space<vmem>>, %arg3: memref<256x128xf32, #tpu.memory_space<vmem>>, %arg4: memref<1x128xf32, #tpu.memory_space<vmem>>, %arg5: memref<8x128xf32, #tpu.memory_space<vmem>>) attributes {dimension_semantics = [#tpu.dimension_semantics<parallel>, #tpu.dimension_semantics<parallel>], iteration_bounds = array<i64: 1, 1>, scalar_prefetch = 0 : i64, scratch_operands = 0 : i64, tpu.core_type = #tpu.core_type<tc>, window_params = [{transform_indices = @transform_0, window_bounds = array<i64: 8, 256>}, {transform_indices = @transform_1, window_bounds = array<i64: 256, 128>}, {transform_indices = @transform_2, window_bounds = array<i64: 1, 128>}, {transform_indices = @transform_3, window_bounds = array<i64: 8, 128>}]} {
    %c0 = arith.constant 0 : index
    %c0_0 = arith.constant 0 : index
    %0 = vector.load %arg2[%c0, %c0_0] : memref<8x256xf32, #tpu.memory_space<vmem>>, vector<8x256xf32>
    %c0_1 = arith.constant 0 : index
    %c0_2 = arith.constant 0 : index
    %1 = vector.load %arg3[%c0_1, %c0_2] : memref<256x128xf32, #tpu.memory_space<vmem>>, vector<256x128xf32>
    %cst = arith.constant dense<0.000000e+00> : vector<8x128xf32>
    %2 = tpu.matmul %0, %1, %cst {dimension_numbers = #tpu.dot_dimension_numbers<[1], [0], [0], [1], [0, 0, 1, 1], [], []>} : vector<8x256xf32>, vector<256x128xf32>, vector<8x128xf32> -> vector<8x128xf32>
    %c0_3 = arith.constant 0 : index
    %c0_4 = arith.constant 0 : index
    %3 = vector.load %arg4[%c0_3, %c0_4] : memref<1x128xf32, #tpu.memory_space<vmem>>, vector<1x128xf32>
    %4 = vector.broadcast %3 : vector<1x128xf32> to vector<8x128xf32>
    %5 = arith.addf %2, %4 : vector<8x128xf32>
    %6 = math.tanh %5 : vector<8x128xf32>
    %c0_5 = arith.constant 0 : index
    %c0_6 = arith.constant 0 : index
    %7 = vector.load %arg5[%c0_5, %c0_6] : memref<8x128xf32, #tpu.memory_space<vmem>>, vector<8x128xf32>
    tpu.vector_store %arg5[%c0_5, %c0_6], %6 {strides = array<i32>} : memref<8x128xf32, #tpu.memory_space<vmem>>, vector<8x128xf32>,
    return
  }
  func.func @transform_0(%arg0: i32, %arg1: i32) -> (i32, i32) {
    %c0_i32 = arith.constant 0 : i32
    %c0_i32_0 = arith.constant 0 : i32
    return %arg0, %c0_i32 : i32, i32
  }
  func.func @transform_1(%arg0: i32, %arg1: i32) -> (i32, i32) {
    %c0_i32 = arith.constant 0 : i32
    %c0_i32_0 = arith.constant 0 : i32
    return %c0_i32, %arg1 : i32, i32
  }
  func.func @transform_2(%arg0: i32, %arg1: i32) -> (i32, i32) {
    %c0_i32 = arith.constant 0 : i32
    %c0_i32_0 = arith.constant 0 : i32
    return %c0_i32, %arg1 : i32, i32
  }
  func.func @transform_3(%arg0: i32, %arg1: i32) -> (i32, i32) {
    %c0_i32 = arith.constant 0 : i32
    return %arg0, %arg1 : i32, i32
  }
}

</mosaic_0001>

<llo_original>
// kernel: connector_mlp_forward.1
$region0: #{connector_mlp_forward.1}
  #allocation0 [shape = 'u32[]', space=smem, size = 0x4, offset = 0x4, fixed_abs, tag = 'smem constant byte address 0x4 - core index']
  #allocation1 [shape = 'u32[72,128]{1,0:T(1,128)}', space=vmem, size = 0x9000, scoped, tag = 'internal scratch']
  %s0 = inlined_call_operand.hbm [shape: f32[8,256], index: 0, kind: input, shape index: {}]
  %s1 = inlined_call_operand.hbm [shape: f32[256,128], index: 1, kind: input, shape index: {}]
  %s2 = inlined_call_operand.vmem [shape: f32[1,128], index: 2, kind: input, shape index: {}]
  %s3 = inlined_call_operand.hbm [shape: f32[8,128], index: 3, kind: output, shape index: {}]
  %s4 = sld [smem:[#allocation0]]
  $region30: #{connector_mlp_forward.1} parent=0
    _
  %s6 = ssub.s32 1, %s4
  %s7 = scalar_select 0, %s6, %s4
  $region1: #{connector_mlp_forward.1} parent=0
    #allocation2 [shape = 'u8[8192]{0}', space=vmem, size = 0x2000, scoped, tag = 'input window, operand 0, single buffered']
    #allocation3 [shape = 's32[1]{0}', space=sflag, size = 0x4, scoped, tag = 'scoped memory for connector_mlp_forward.1']
    #allocation4 [shape = 's32[1]{0}', space=sflag, size = 0x4, scoped, tag = 'scoped memory for connector_mlp_forward.1']
    #allocation5 [shape = 'u8[131072]{0}', space=vmem, size = 0x20000, scoped, tag = 'input window, operand 1, single buffered']
    #allocation6 [shape = 's32[1]{0}', space=sflag, size = 0x4, scoped, tag = 'scoped memory for connector_mlp_forward.1']
    #allocation7 [shape = 'u8[4096]{0}', space=vmem, size = 0x1000, scoped, tag = 'output window, operand 0, single buffered']
    %8 = vsyncpa [#allocation3], 0
    %9 = vsyncpa [#allocation6], 0
    %10 = vsyncpa [#allocation4], 0
    // Predicated region
    $region2: #{connector_mlp_forward.1} parent=1 // pred_check
      _
    $region3: #{connector_mlp_forward.1} parent=1 // pred_check_branch
      %12 = sbr.rel (0) target = $region5
    $region4: #{connector_mlp_forward.1} parent=1 // pred_region
      %14 = vsyncadd [#allocation3], 0
      %s16 = sshll.u32 %s0, 4
      %s17 = int_to_ptr.hbm [resolvable:$true] %s16
      %s18 = sshll.u32 [#allocation2], 4
      %s19 = int_to_ptr.vmem [resolvable:$true] %s18
      %21 = dma.hbm_to_vmem [thread:$0]  %s17, 256, %s19, [#allocation3]
    $region5: #{connector_mlp_forward.1} parent=1 // pred_fallthru
      _
    // Predicated region
    $region6: #{connector_mlp_forward.1} parent=1 // pred_check
      _
    $region7: #{connector_mlp_forward.1} parent=1 // pred_check_branch
      %23 = sbr.rel (0) target = $region9
    $region8: #{connector_mlp_forward.1} parent=1 // pred_region
      %25 = vsyncadd [#allocation6], 0
      %s26 = sshll.u32 %s1, 4
      %s27 = int_to_ptr.hbm [resolvable:$true] %s26
      %s28 = sshll.u32 [#allocation5], 4
      %s29 = int_to_ptr.vmem [resolvable:$true] %s28
      %34 = dma.hbm_to_vmem [thread:$0]  %s27, 4096, %s29, [#allocation6], 128, 128, 8
    $region9: #{connector_mlp_forward.1} parent=1 // pred_fallthru
      _
    // Predicated region
    $region10: #{connector_mlp_forward.1} parent=1 // pred_check
      _
    $region11: #{connector_mlp_forward.1} parent=1 // pred_check_branch
      %36 = sbr.rel (0) target = $region13
    $region12: #{connector_mlp_forward.1} parent=1 // pred_region
      _
    $region13: #{connector_mlp_forward.1} parent=1 // pred_fallthru
      _
    // Predicated region
    $region14: #{connector_mlp_forward.1} parent=1 // pred_check
      _
    $region15: #{connector_mlp_forward.1} parent=1 // pred_check_branch
      %38 = sbr.rel (0) target = $region17
    $region16: #{connector_mlp_forward.1} parent=1 // pred_region
      %40 = dma.done [#allocation3], 256
    $region17: #{connector_mlp_forward.1} parent=1 // pred_fallthru
      _
    // Predicated region
    $region18: #{connector_mlp_forward.1} parent=1 // pred_check
      _
    $region19: #{connector_mlp_forward.1} parent=1 // pred_check_branch
      %42 = sbr.rel (0) target = $region21
    $region20: #{connector_mlp_forward.1} parent=1 // pred_region
      %44 = dma.done [#allocation6], 4096
    $region21: #{connector_mlp_forward.1} parent=1 // pred_fallthru
      _
    %v45 = vld [vmem:[#allocation2] sm:$0xff]
    %v46 = vld [vmem:[#allocation2 + $0x8] sm:$0xff]
    %v47 = vld [vmem:[#allocation5] sm:$0xff]
    %v48 = vld [vmem:[#allocation5 + $0x8] sm:$0xff]
    %v49 = vld [vmem:[#allocation5 + $0x10] sm:$0xff]
    %v50 = vld [vmem:[#allocation5 + $0x18] sm:$0xff]
    %v51 = vld [vmem:[#allocation5 + $0x20] sm:$0xff]
    %v52 = vld [vmem:[#allocation5 + $0x28] sm:$0xff]
    %v53 = vld [vmem:[#allocation5 + $0x30] sm:$0xff]
    %v54 = vld [vmem:[#allocation5 + $0x38] sm:$0xff]
    %v55 = vld [vmem:[#allocation5 + $0x40] sm:$0xff]
    %v56 = vld [vmem:[#allocation5 + $0x48] sm:$0xff]
    %v57 = vld [vmem:[#allocation5 + $0x50] sm:$0xff]
    %v58 = vld [vmem:[#allocation5 + $0x58] sm:$0xff]
    %v59 = vld [vmem:[#allocation5 + $0x60] sm:$0xff]
    %v60 = vld [vmem:[#allocation5 + $0x68] sm:$0xff]
    %v61 = vld [vmem:[#allocation5 + $0x70] sm:$0xff]
    %v62 = vld [vmem:[#allocation5 + $0x78] sm:$0xff]
    %v63 = vld [vmem:[#allocation5 + $0x80] sm:$0xff]
    %v64 = vld [vmem:[#allocation5 + $0x88] sm:$0xff]
    %v65 = vld [vmem:[#allocation5 + $0x90] sm:$0xff]
    %v66 = vld [vmem:[#allocation5 + $0x98] sm:$0xff]
    %v67 = vld [vmem:[#allocation5 + $0xa0] sm:$0xff]
    %v68 = vld [vmem:[#allocation5 + $0xa8] sm:$0xff]
    %v69 = vld [vmem:[#allocation5 + $0xb0] sm:$0xff]
    %v70 = vld [vmem:[#allocation5 + $0xb8] sm:$0xff]
    %v71 = vld [vmem:[#allocation5 + $0xc0] sm:$0xff]
    %v72 = vld [vmem:[#allocation5 + $0xc8] sm:$0xff]
    %v73 = vld [vmem:[#allocation5 + $0xd0] sm:$0xff]
    %v74 = vld [vmem:[#allocation5 + $0xd8] sm:$0xff]
    %v75 = vld [vmem:[#allocation5 + $0xe0] sm:$0xff]
    %v76 = vld [vmem:[#allocation5 + $0xe8] sm:$0xff]
    %v77 = vld [vmem:[#allocation5 + $0xf0] sm:$0xff]
    %v78 = vld [vmem:[#allocation5 + $0xf8] sm:$0xff]
    %v79 = vld [vmem:[%s2] sm:$0x1]
    %v81 = vperm.slane %v79, 0
    %83 = vmatpush.msra.mxu0 %v62
    %84 = vmatpush.msra.mxu0 %v61
    %85 = vmatpush.msra.mxu0 %v60
    %86 = vmatpush.msra.mxu0 %v59
    %87 = vmatpush.msra.mxu0 %v58
    %88 = vmatpush.msra.mxu0 %v57
    %89 = vmatpush.msra.mxu0 %v56
    %90 = vmatpush.msra.mxu0 %v55
    %91 = vmatpush.msra.mxu0 %v54
    %92 = vmatpush.msra.mxu0 %v53
    %93 = vmatpush.msra.mxu0 %v52
    %94 = vmatpush.msra.mxu0 %v51
    %95 = vmatpush.msra.mxu0 %v50
    %96 = vmatpush.msra.mxu0 %v49
    %97 = vmatpush.msra.mxu0 %v48
    %98 = vmatpush.msra.mxu0 %v47
    %99 = vmatmul.f32.gmra.mxu0 %v45
    %v100 = vpop.f32.mrf.mxu0
    %v101 = vadd.f32 %v81, %v100
    %102 = vdwg.mxu0
    %103 = vmatpush.msra.mxu0 %v78
    %104 = vmatpush.msra.mxu0 %v77
    %105 = vmatpush.msra.mxu0 %v76
    %106 = vmatpush.msra.mxu0 %v75
    %107 = vmatpush.msra.mxu0 %v74
    %108 = vmatpush.msra.mxu0 %v73
    %109 = vmatpush.msra.mxu0 %v72
    %110 = vmatpush.msra.mxu0 %v71
    %111 = vmatpush.msra.mxu0 %v70
    %112 = vmatpush.msra.mxu0 %v69
    %113 = vmatpush.msra.mxu0 %v68
    %114 = vmatpush.msra.mxu0 %v67
    %115 = vmatpush.msra.mxu0 %v66
    %116 = vmatpush.msra.mxu0 %v65
    %117 = vmatpush.msra.mxu0 %v64
    %118 = vmatpush.msra.mxu0 %v63
    %119 = vmatmul.f32.gmra.mxu0 %v46
    %v120 = vpop.f32.mrf.mxu0
    %v121 = vadd.f32 %v101, %v120
    %122 = vdwg.mxu0
    %v123 = vtanh.pop %v121
    %124 = vst [vmem:[#allocation7] sm:$0xff] %v123
    // Predicated region
    $region22: #{connector_mlp_forward.1} parent=1 // pred_check
      _
    $region23: #{connector_mlp_forward.1} parent=1 // pred_check_branch
      %126 = sbr.rel (0) target = $region25
    $region24: #{connector_mlp_forward.1} parent=1 // pred_region
      %128 = vsyncadd [#allocation4], 0
      %s130 = sshll.u32 [#allocation7], 4
      %s131 = int_to_ptr.vmem [resolvable:$true] %s130
      %s132 = sshll.u32 %s3, 4
      %s133 = int_to_ptr.hbm [resolvable:$true] %s132
      %135 = dma.vmem_to_hbm [thread:$0]  %s131, 128, %s133, [#allocation4]
    $region25: #{connector_mlp_forward.1} parent=1 // pred_fallthru
      _
    // Predicated region
    $region26: #{connector_mlp_forward.1} parent=1 // pred_check
      _
    $region27: #{connector_mlp_forward.1} parent=1 // pred_check_branch
      %137 = sbr.rel (0) target = $region29
    $region28: #{connector_mlp_forward.1} parent=1 // pred_region
      %139 = dma.done [#allocation4], 128
    $region29: #{connector_mlp_forward.1} parent=1 // pred_fallthru
      _
    %140 = vsyncpa [#allocation3], 1
    %141 = vsyncpa [#allocation6], 1
    %142 = vsyncpa [#allocation4], 1

</llo_original>
